<compile_context>
chip_gen: v7x
topology: tpu7x:2x2x1
jax: 0.10.0
libtpu: 0.0.40
codegen_flags: <defaults>
</compile_context>

<pallas_src>
import numpy as np
import jax
import jax.numpy as jnp
from jax import lax
from jax.experimental import pallas as pl
from jax.experimental.pallas import tpu as pltpu

DOWN_SIZES = (1, 2, 3, 6)
BN_EPS = 1e-5


# ---------------------------------------------------------------------------
# Static (index-only) matrices: adaptive-avg-pool and bilinear-upsample bases.
# ---------------------------------------------------------------------------
def adaptive_pool_matrix(out_len, in_len):
    """Row i averages input range [floor(i*L/O), ceil((i+1)*L/O)) (PyTorch AdaptiveAvgPool2d)."""
    P = np.zeros((out_len, in_len), np.float32)
    for i in range(out_len):
        start = (i * in_len) // out_len
        end = ((i + 1) * in_len + out_len - 1) // out_len
        P[i, start:end] = 1.0 / (end - start)
    return P


def bilinear_matrix(out_len, in_len):
    """Bilinear interpolation weights, align_corners=True (pytorchcv InterpolationBlock)."""
    U = np.zeros((out_len, in_len), np.float32)
    if in_len == 1:
        U[:, 0] = 1.0
        return U
    for h in range(out_len):
        src = h * (in_len - 1) / (out_len - 1) if out_len > 1 else 0.0
        i0 = min(int(np.floor(src)), in_len - 1)
        i1 = min(i0 + 1, in_len - 1)
        frac = src - i0
        U[h, i0] += 1.0 - frac
        U[h, i1] += frac
    return U


def _bf16_round(a):
    """Round to the nearest bf16-representable value (kept as f32 numpy)."""
    return np.asarray(jnp.asarray(a, jnp.float32).astype(jnp.bfloat16).astype(jnp.float32))


def build_static(H, W, C):
    assert C % 4 == 0, "in_channels must be divisible by 4 (mid_channels = C // 4)"
    Cm = C // 4
    HW = H * W
    pool_blocks, up_blocks, per_branch = [], [], []
    for ds in DOWN_SIZES:
        Ph = _bf16_round(adaptive_pool_matrix(ds, H))
        Pw = _bf16_round(adaptive_pool_matrix(ds, W))
        Uh = _bf16_round(bilinear_matrix(H, ds))
        Uw = _bf16_round(bilinear_matrix(W, ds))
        pool_blocks.append(np.kron(Ph, Pw))   # (ds*ds, HW)
        up_blocks.append(np.kron(Uh, Uw))     # (HW, ds*ds)
        per_branch.append((jnp.asarray(Ph), jnp.asarray(Pw),
                           jnp.asarray(Uh), jnp.asarray(Uw)))
    P_comb = np.concatenate(pool_blocks, axis=0)     # (S, HW), S = 50
    U_comb = np.concatenate(up_blocks, axis=1)       # (HW, S)
    S = P_comb.shape[0]
    Sp = ((S + 7) // 8) * 8                          # pad S -> 56 (sublane granule)

    # Branch mask in transposed layout: rows = branch output channels,
    # cols = pooled cells. Padded cells are all-zero.
    maskT = np.zeros((len(DOWN_SIZES) * Cm, Sp), np.float32)
    row = 0
    for k, ds in enumerate(DOWN_SIZES):
        maskT[k * Cm:(k + 1) * Cm, row:row + ds * ds] = 1.0
        row += ds * ds

    PT = np.zeros((HW, Sp), np.float32)
    PT[:, :S] = P_comb.T                             # (HW, Sp)
    UT = np.zeros((Sp, HW), np.float32)
    UT[:S, :] = U_comb.T                             # (Sp, HW)

    return {
        "PT": jnp.asarray(PT),
        "UT": jnp.asarray(UT),
        "maskT": jnp.asarray(maskT),
        "per_branch": per_branch,
    }


# ---------------------------------------------------------------------------
# Deterministic parameter init (conv1x1 bias=False + BN folded to scale/bias).
# ---------------------------------------------------------------------------
def make_params(key, C, O):
    assert C % 4 == 0, "in_channels must be divisible by 4"
    Cm = C // 4
    keys = jax.random.split(key, 5 * (len(DOWN_SIZES) + 1))

    def conv_bn(kchunk, cin, cout):
        kw, kg, kb, km, kv = kchunk
        w = 0.2 * jax.random.normal(kw, (cin, cout), jnp.float32)      # conv1x1 (Cin, Cout)
        gamma = 1.0 + 0.1 * jax.random.normal(kg, (cout,), jnp.float32)
        beta = 0.1 * jax.random.normal(kb, (cout,), jnp.float32)
        mean = 0.05 * jax.random.normal(km, (cout,), jnp.float32)
        var = 0.5 + jax.random.uniform(kv, (cout,), jnp.float32)
        s = gamma / jnp.sqrt(var + BN_EPS)
        # Fold BN scale into the weight; round so bf16 storage in the kernel is exact.
        w_folded = (w * s[None, :]).astype(jnp.bfloat16).astype(jnp.float32)
        return w_folded, beta - mean * s                                # folded weight, bias

    branch = [conv_bn(keys[5 * i:5 * i + 5], C, Cm) for i in range(len(DOWN_SIZES))]
    final = conv_bn(keys[-5:], 2 * C, O)
    return branch, final


# ---------------------------------------------------------------------------
# Pallas kernel.  Transposed (channels-on-sublanes, H*W-on-lanes) layout:
#   pooled_T = x_T @ P^T ; s_T = relu(w_all^T @ pooled_T + b) * mask
#   u_T = s_T @ U^T ; out_T = relu(wf^T @ [x_T; u_T] + bf)
# One grid step processes Bt batch elements (unrolled loop).
# ---------------------------------------------------------------------------
def fast_pyramid_pooling_kernel(x_ref, pt_ref, wallT_ref, ball_ref,
                                maskT_ref, ut_ref, wfT_ref, bf_ref,
                                o_ref, cat_ref):
    Bt, C, HW = x_ref.shape

    def body(b, carry):
        xT = x_ref[b]                                                    # (C, HW) bf16

        # Adaptive average pools for all 4 down-sizes at once (lane dim = Sp).
        pooled = jnp.dot(xT, pt_ref[...],
                         preferred_element_type=jnp.float32)            # (C, Sp)

        # Branch 1x1 conv + folded BN + ReLU; block mask keeps each branch's rows.
        s = jnp.dot(wallT_ref[...], pooled.astype(jnp.bfloat16),
                    preferred_element_type=jnp.float32)                  # (4Cm, Sp)
        s = jnp.maximum(s + ball_ref[...], 0.0) * maskT_ref[...]

        # Bilinear upsample of all branches to (H*W,) lanes.
        u = jnp.dot(s.astype(jnp.bfloat16), ut_ref[...],
                    preferred_element_type=jnp.float32)                  # (C, HW)

        # Stage concat([x, u]) in VMEM and do ONE final K=2C matmul.
        cat_ref[:C, :] = xT
        cat_ref[C:, :] = u.astype(cat_ref.dtype)
        out = jnp.dot(wfT_ref[...], cat_ref[...],
                      preferred_element_type=jnp.float32)                # (O, HW)
        o_ref[b] = jnp.maximum(out + bf_ref[...], 0.0).astype(o_ref.dtype)
        return carry

    lax.fori_loop(0, Bt, body, 0, unroll=True)


def fast_pyramid_pooling(x_nchw, params, static, *, batch_tile=1):
    B, C, H, W = x_nchw.shape
    assert C % 4 == 0, "in_channels must be divisible by 4"
    assert B % batch_tile == 0
    branch, (wf, bf) = params
    assert wf.shape[0] == 2 * C, "final conv expects 2*C input channels"
    PT, UT, maskT = static["PT"], static["UT"], static["maskT"]
    HW = H * W
    O = wf.shape[1]
    Bt = batch_tile

    # Free contiguous reshape of NCHW -> (B, C, H*W); channels land on sublanes,
    # spatial on lanes.  bf16 storage halves HBM->VMEM bytes.
    x_flat = x_nchw.reshape(B, C, HW).astype(jnp.bfloat16)

    w_allT = jnp.concatenate([w for w, _ in branch], axis=1).T.astype(jnp.bfloat16)  # (4Cm, C)
    b_all = jnp.concatenate([b for _, b in branch], axis=0)[:, None]                 # (4Cm, 1)
    wfT = wf.T.astype(jnp.bfloat16)                                                  # (O, 2C)
    bf2 = bf[:, None]                                                                # (O, 1)
    PT_b = PT.astype(jnp.bfloat16)                                                   # (HW, Sp)
    UT_b = UT.astype(jnp.bfloat16)                                                   # (Sp, HW)

    def inv(arr):
        # Grid-invariant operand: full block, constant index_map.
        # (At production sizes, add pipeline_mode=pl.Buffered(1) here on v7x.)
        nd = arr.ndim
        return pl.BlockSpec(arr.shape, lambda b, _n=nd: (0,) * _n)

    out = pl.pallas_call(
        fast_pyramid_pooling_kernel,
        out_shape=jax.ShapeDtypeStruct((B, O, HW), jnp.float32),
        grid_spec=pltpu.PrefetchScalarGridSpec(
            num_scalar_prefetch=0,
            grid=(B // Bt,),
            in_specs=[
                pl.BlockSpec((Bt, C, HW), lambda b: (b, 0, 0)),
                inv(PT_b), inv(w_allT), inv(b_all), inv(maskT),
                inv(UT_b), inv(wfT), inv(bf2),
            ],
            out_specs=pl.BlockSpec((Bt, O, HW), lambda b: (b, 0, 0)),
            scratch_shapes=[pltpu.VMEM((2 * C, HW), jnp.bfloat16)],
        ),
        compiler_params=pltpu.CompilerParams(
            dimension_semantics=("parallel",),           # shards batch over v7x's 2 TCs
            vmem_limit_bytes=32 * 1024 * 1024,
        ),
    )(x_flat, PT_b, w_allT, b_all, maskT, UT_b, wfT, bf2)

    return out.reshape(B, O, H, W)                       # NCHW output, free reshape


# ---------------------------------------------------------------------------
# Pure-JAX f32 reference (per-branch, separable pooling / bilinear upsample).
# ---------------------------------------------------------------------------
def reference(x_nchw, params, static):
    branch, (wf, bf) = params
    feats = [x_nchw]
    for (w, b), (Ph, Pw, Uh, Uw) in zip(branch, static["per_branch"]):
        pooled = jnp.einsum('ih,jw,bchw->bcij', Ph, Pw, x_nchw)
        y = jnp.maximum(jnp.einsum('bcij,cm->bmij', pooled, w)
                        + b[None, :, None, None], 0.0)
        u = jnp.einsum('hi,wj,bmij->bmhw', Uh, Uw, y)
        feats.append(u)
    cat = jnp.concatenate(feats, axis=1)
    return jnp.maximum(jnp.einsum('bchw,co->bohw', cat, wf)
                       + bf[None, :, None, None], 0.0)


if __name__ == "__main__":
    key = jax.random.PRNGKey(0)
    kx, kp = jax.random.split(key)

    B, C, H, W = 2, 8, 16, 16        # in_channels=8 -> mid_channels=2
    O = 8                            # out_channels

    # PyTorch-convention NCHW input (made bf16-representable so the bf16
    # operand-storage optimization does not widen the comparison tolerance).
    x_nchw = jax.random.normal(kx, (B, C, H, W), jnp.float32)
    x_nchw = x_nchw.astype(jnp.bfloat16).astype(jnp.float32)

    params = make_params(kp, C, O)
    static = build_static(H, W, C)

    out = fast_pyramid_pooling(x_nchw, params, static, batch_tile=1)
    out = jax.block_until_ready(out)

    ref = reference(x_nchw, params, static)
    assert out.shape == (B, O, H, W)
    # Tolerance covers the bf16 intermediate casts (pooled/s/u) in the kernel.
    assert bool(jnp.allclose(out, ref, rtol=2e-2, atol=2e-2)), "kernel/reference mismatch"

    print("KERNEL_OK")
</pallas_src>

<mosaic_0001>
module attributes {stable_mosaic.version = 11 : i64} {
  func.func @fast_pyramid_pooling_kernel(%arg0: i32, %arg1: memref<1x8x256xbf16, #tpu.memory_space<vmem>>, %arg2: memref<256x56xbf16, #tpu.memory_space<vmem>>, %arg3: memref<8x8xbf16, #tpu.memory_space<vmem>>, %arg4: memref<8x1xf32, #tpu.memory_space<vmem>>, %arg5: memref<8x56xf32, #tpu.memory_space<vmem>>, %arg6: memref<56x256xbf16, #tpu.memory_space<vmem>>, %arg7: memref<8x16xbf16, #tpu.memory_space<vmem>>, %arg8: memref<8x1xf32, #tpu.memory_space<vmem>>, %arg9: memref<1x8x256xf32, #tpu.memory_space<vmem>>, %arg10: memref<16x256xbf16, #tpu.memory_space<vmem>>) attributes {dimension_semantics = [#tpu.dimension_semantics<parallel>], iteration_bounds = array<i64: 2>, scalar_prefetch = 0 : i64, scratch_operands = 1 : i64, tpu.core_type = #tpu.core_type<tc>, window_params = [{transform_indices = @transform_0, window_bounds = array<i64: 1, 8, 256>}, {pipeline_mode = #tpu.pipeline_mode<synchronous>, transform_indices = @transform_1, window_bounds = array<i64: 256, 56>}, {pipeline_mode = #tpu.pipeline_mode<synchronous>, transform_indices = @transform_2, window_bounds = array<i64: 8, 8>}, {pipeline_mode = #tpu.pipeline_mode<synchronous>, transform_indices = @transform_3, window_bounds = array<i64: 8, 1>}, {pipeline_mode = #tpu.pipeline_mode<synchronous>, transform_indices = @transform_4, window_bounds = array<i64: 8, 56>}, {pipeline_mode = #tpu.pipeline_mode<synchronous>, transform_indices = @transform_5, window_bounds = array<i64: 56, 256>}, {pipeline_mode = #tpu.pipeline_mode<synchronous>, transform_indices = @transform_6, window_bounds = array<i64: 8, 16>}, {pipeline_mode = #tpu.pipeline_mode<synchronous>, transform_indices = @transform_7, window_bounds = array<i64: 8, 1>}, {transform_indices = @transform_8, window_bounds = array<i64: 1, 8, 256>}]} {
    %c0_i32 = arith.constant 0 : i32
    %0 = arith.index_cast %c0_i32 : i32 to index
    %c0 = arith.constant 0 : index
    %c0_0 = arith.constant 0 : index
    %1 = vector.load %arg1[%0, %c0, %c0_0] : memref<1x8x256xbf16, #tpu.memory_space<vmem>>, vector<1x8x256xbf16>
    %2 = vector.shape_cast %1 : vector<1x8x256xbf16> to vector<8x256xbf16>
    %c0_1 = arith.constant 0 : index
    %c0_2 = arith.constant 0 : index
    %3 = vector.load %arg2[%c0_1, %c0_2] : memref<256x56xbf16, #tpu.memory_space<vmem>>, vector<256x56xbf16>
    %cst = arith.constant dense<0.000000e+00> : vector<8x56xf32>
    %4 = tpu.matmul %2, %3, %cst {dimension_numbers = #tpu.dot_dimension_numbers<[1], [0], [0], [1], [0, 0, 1, 1], [], []>} : vector<8x256xbf16>, vector<256x56xbf16>, vector<8x56xf32> -> vector<8x56xf32>
    %c0_3 = arith.constant 0 : index
    %c0_4 = arith.constant 0 : index
    %5 = vector.load %arg3[%c0_3, %c0_4] : memref<8x8xbf16, #tpu.memory_space<vmem>>, vector<8x8xbf16>
    %6 = arith.truncf %4 : vector<8x56xf32> to vector<8x56xbf16>
    %cst_5 = arith.constant dense<0.000000e+00> : vector<8x56xf32>
    %7 = tpu.matmul %5, %6, %cst_5 {dimension_numbers = #tpu.dot_dimension_numbers<[1], [0], [0], [1], [0, 0, 1, 1], [], []>} : vector<8x8xbf16>, vector<8x56xbf16>, vector<8x56xf32> -> vector<8x56xf32>
    %c0_6 = arith.constant 0 : index
    %c0_7 = arith.constant 0 : index
    %8 = vector.load %arg4[%c0_6, %c0_7] : memref<8x1xf32, #tpu.memory_space<vmem>>, vector<8x1xf32>
    %9 = vector.broadcast %8 : vector<8x1xf32> to vector<8x56xf32>
    %10 = arith.addf %7, %9 : vector<8x56xf32>
    %cst_8 = arith.constant 0.000000e+00 : f32
    %11 = vector.broadcast %cst_8 : f32 to vector<8x56xf32>
    %12 = arith.maximumf %10, %11 : vector<8x56xf32>
    %c0_9 = arith.constant 0 : index
    %c0_10 = arith.constant 0 : index
    %13 = vector.load %arg5[%c0_9, %c0_10] : memref<8x56xf32, #tpu.memory_space<vmem>>, vector<8x56xf32>
    %14 = arith.mulf %12, %13 : vector<8x56xf32>
    %15 = arith.truncf %14 : vector<8x56xf32> to vector<8x56xbf16>
    %c0_11 = arith.constant 0 : index
    %c0_12 = arith.constant 0 : index
    %16 = vector.load %arg6[%c0_11, %c0_12] : memref<56x256xbf16, #tpu.memory_space<vmem>>, vector<56x256xbf16>
    %cst_13 = arith.constant dense<0.000000e+00> : vector<8x256xf32>
    %17 = tpu.matmul %15, %16, %cst_13 {dimension_numbers = #tpu.dot_dimension_numbers<[1], [0], [0], [1], [0, 0, 1, 1], [], []>} : vector<8x56xbf16>, vector<56x256xbf16>, vector<8x256xf32> -> vector<8x256xf32>
    %c0_14 = arith.constant 0 : index
    %c0_15 = arith.constant 0 : index
    %18 = vector.load %arg10[%c0_14, %c0_15] : memref<16x256xbf16, #tpu.memory_space<vmem>>, vector<8x256xbf16>
    tpu.vector_store %arg10[%c0_14, %c0_15], %2 {strides = array<i32>} : memref<16x256xbf16, #tpu.memory_space<vmem>>, vector<8x256xbf16>,
    %19 = arith.truncf %17 : vector<8x256xf32> to vector<8x256xbf16>
    %c8 = arith.constant 8 : index
    %c0_16 = arith.constant 0 : index
    %20 = vector.load %arg10[%c8, %c0_16] : memref<16x256xbf16, #tpu.memory_space<vmem>>, vector<8x256xbf16>
    tpu.vector_store %arg10[%c8, %c0_16], %19 {strides = array<i32>} : memref<16x256xbf16, #tpu.memory_space<vmem>>, vector<8x256xbf16>,
    %c0_17 = arith.constant 0 : index
    %c0_18 = arith.constant 0 : index
    %21 = vector.load %arg7[%c0_17, %c0_18] : memref<8x16xbf16, #tpu.memory_space<vmem>>, vector<8x16xbf16>
    %c0_19 = arith.constant 0 : index
    %c0_20 = arith.constant 0 : index
    %22 = vector.load %arg10[%c0_19, %c0_20] : memref<16x256xbf16, #tpu.memory_space<vmem>>, vector<16x256xbf16>
    %cst_21 = arith.constant dense<0.000000e+00> : vector<8x256xf32>
    %23 = tpu.matmul %21, %22, %cst_21 {dimension_numbers = #tpu.dot_dimension_numbers<[1], [0], [0], [1], [0, 0, 1, 1], [], []>} : vector<8x16xbf16>, vector<16x256xbf16>, vector<8x256xf32> -> vector<8x256xf32>
    %c0_22 = arith.constant 0 : index
    %c0_23 = arith.constant 0 : index
    %24 = vector.load %arg8[%c0_22, %c0_23] : memref<8x1xf32, #tpu.memory_space<vmem>>, vector<8x1xf32>
    %25 = vector.broadcast %24 : vector<8x1xf32> to vector<8x256xf32>
    %26 = arith.addf %23, %25 : vector<8x256xf32>
    %cst_24 = arith.constant 0.000000e+00 : f32
    %27 = vector.broadcast %cst_24 : f32 to vector<8x256xf32>
    %28 = arith.maximumf %26, %27 : vector<8x256xf32>
    %29 = arith.index_cast %c0_i32 : i32 to index
    %c0_25 = arith.constant 0 : index
    %c0_26 = arith.constant 0 : index
    %30 = vector.load %arg9[%29, %c0_25, %c0_26] : memref<1x8x256xf32, #tpu.memory_space<vmem>>, vector<1x8x256xf32>
    %31 = vector.shape_cast %30 : vector<1x8x256xf32> to vector<8x256xf32>
    %32 = vector.shape_cast %28 : vector<8x256xf32> to vector<1x8x256xf32>
    tpu.vector_store %arg9[%29, %c0_25, %c0_26], %32 {strides = array<i32>} : memref<1x8x256xf32, #tpu.memory_space<vmem>>, vector<1x8x256xf32>,
    %c1_i32 = arith.constant 1 : i32
    return
  }
  func.func @transform_0(%arg0: i32) -> (i32, i32, i32) {
    %c0_i32 = arith.constant 0 : i32
    %c0_i32_0 = arith.constant 0 : i32
    %c0_i32_1 = arith.constant 0 : i32
    return %arg0, %c0_i32, %c0_i32_0 : i32, i32, i32
  }
  func.func @transform_1(%arg0: i32) -> (i32, i32) {
    %c0_i32 = arith.constant 0 : i32
    %c0_i32_0 = arith.constant 0 : i32
    %c0_i32_1 = arith.constant 0 : i32
    return %c0_i32, %c0_i32_0 : i32, i32
  }
  func.func @transform_2(%arg0: i32) -> (i32, i32) {
    %c0_i32 = arith.constant 0 : i32
    %c0_i32_0 = arith.constant 0 : i32
    %c0_i32_1 = arith.constant 0 : i32
    return %c0_i32, %c0_i32_0 : i32, i32
  }
  func.func @transform_3(%arg0: i32) -> (i32, i32) {
    %c0_i32 = arith.constant 0 : i32
    %c0_i32_0 = arith.constant 0 : i32
    %c0_i32_1 = arith.constant 0 : i32
    return %c0_i32, %c0_i32_0 : i32, i32
  }
  func.func @transform_4(%arg0: i32) -> (i32, i32) {
    %c0_i32 = arith.constant 0 : i32
    %c0_i32_0 = arith.constant 0 : i32
    %c0_i32_1 = arith.constant 0 : i32
    return %c0_i32, %c0_i32_0 : i32, i32
  }
  func.func @transform_5(%arg0: i32) -> (i32, i32) {
    %c0_i32 = arith.constant 0 : i32
    %c0_i32_0 = arith.constant 0 : i32
    %c0_i32_1 = arith.constant 0 : i32
    return %c0_i32, %c0_i32_0 : i32, i32
  }
  func.func @transform_6(%arg0: i32) -> (i32, i32) {
    %c0_i32 = arith.constant 0 : i32
    %c0_i32_0 = arith.constant 0 : i32
    %c0_i32_1 = arith.constant 0 : i32
    return %c0_i32, %c0_i32_0 : i32, i32
  }
  func.func @transform_7(%arg0: i32) -> (i32, i32) {
    %c0_i32 = arith.constant 0 : i32
    %c0_i32_0 = arith.constant 0 : i32
    %c0_i32_1 = arith.constant 0 : i32
    return %c0_i32, %c0_i32_0 : i32, i32
  }
  func.func @transform_8(%arg0: i32) -> (i32, i32, i32) {
    %c0_i32 = arith.constant 0 : i32
    %c0_i32_0 = arith.constant 0 : i32
    %c0_i32_1 = arith.constant 0 : i32
    return %arg0, %c0_i32, %c0_i32_0 : i32, i32, i32
  }
}

</mosaic_0001>

<llo_original>
// kernel: tpu_custom_call.1
$region0: #{tpu_custom_call.1}
  #allocation0 [shape = 'u32[]', space=smem, size = 0x4, offset = 0x4, fixed_abs, tag = 'smem constant byte address 0x4 - core index']
  #allocation1 [shape = 'u32[144,128]{1,0:T(1,128)}', space=vmem, size = 0x12000, scoped, tag = 'internal scratch']
  #allocation2 [shape = 'bf16[16,256]{1,0:T(16,128)(2,1)}', space=vmem, size = 0x2000, scoped, tag = 'scratch operand']
  %s0 = inlined_call_operand.vmem [shape: bf16[2,8,256], index: 0, kind: input, shape index: {}]
  %s1 = inlined_call_operand.vmem [shape: bf16[256,56], index: 1, kind: input, shape index: {}]
  %s2 = inlined_call_operand.vmem [shape: bf16[8,8], index: 2, kind: input, shape index: {}]
  %s3 = inlined_call_operand.vmem [shape: f32[8,1], index: 3, kind: input, shape index: {}]
  %s4 = inlined_call_operand.vmem [shape: f32[8,56], index: 4, kind: input, shape index: {}]
  %s5 = inlined_call_operand.vmem [shape: bf16[56,256], index: 5, kind: input, shape index: {}]
  %s6 = inlined_call_operand.vmem [shape: bf16[8,16], index: 6, kind: input, shape index: {}]
  %s7 = inlined_call_operand.vmem [shape: f32[8,1], index: 7, kind: input, shape index: {}]
  %s8 = inlined_call_operand.hbm [shape: f32[2,8,256], index: 8, kind: output, shape index: {}]
  %s9 = sld [smem:[#allocation0]]
  $region65: #{tpu_custom_call.1} parent=0
    _
  %s11 = ssub.s32 1, %s9
  %s12 = scalar_select 0, %s11, %s9
  $region1: #{tpu_custom_call.1} parent=0
    #allocation3 [shape = 'u8[16384]{0}', space=vmem, size = 0x4000, scoped, tag = 'output window, operand 0']
    #allocation4 [shape = 's32[2]{0}', space=sflag, size = 0x8, scoped, tag = 'scoped memory for tpu_custom_call.1']
    %13 = vsyncpa [#allocation4], 0
    %s14 = scalar_lea.sflag [#allocation4], 1
    %15 = vsyncpa %s14, 0
    loop: start=0, step=1, limit=4
    $region2: #{tpu_custom_call.1} parent=1 // loop_pre_header
      _
    $region3: #{tpu_custom_call.1} parent=1 // loop_header
      %s17 = sphi 0, %s21
      %p18 = scmp.ge.s32.totalorder %s17, 4
      %s27 = sphi 0, %s29
      %s30 = sphi 0, %s27
      %s31 = sphi 0, %s30
      %s47 = sphi 0, %s31
      %s51 = sphi 0, %s51
      %s53 = sphi 0, %s51
      %s54 = sphi 0, %s53
      %s68 = sphi 0, %s54
      %s72 = sphi 0, %s72
      %s74 = sphi 0, %s72
      %s75 = sphi 0, %s74
      %s89 = sphi 0, %s75
      %s93 = sphi 0, %s93
      %s95 = sphi 0, %s93
      %s96 = sphi 0, %s95
      %s110 = sphi 0, %s96
      %s114 = sphi 0, %s114
      %s116 = sphi 0, %s114
      %s117 = sphi 0, %s116
      %s131 = sphi 0, %s117
      %s135 = sphi 0, %s135
      %s137 = sphi 0, %s135
      %s138 = sphi 0, %s137
      %s152 = sphi 0, %s138
      %s156 = sphi 0, %s156
      %s158 = sphi 0, %s156
      %s159 = sphi 0, %s158
      %s173 = sphi 0, %s159
      %s177 = sphi 0, %s177
      %s179 = sphi 0, %s177
      %s180 = sphi 0, %s179
      %s194 = sphi 0, %s180
      %s200 = sphi 0, %s202
      %s203 = sphi 0, %s200
      %s204 = sphi 0, %s203
      %s220 = sphi 0, %s204
    $region4: #{tpu_custom_call.1} parent=1 // loop_header_branch
      %20 = sbr.rel (%p18) target = $region8
    $region5: #{tpu_custom_call.1} parent=1 // loop_body
      %s22 = ssub.s32 %s17, 1
      %s23 = ssub.s32 %s17, 2
      %s24 = sadd.s32 %s17, 1
      %s25 = ssub.s32 %s17, %s24
      %p26 = scmp.eq.s32.totalorder %s25, 0
      %s28 = sadd.s32 %s27, 1
      %s29 = scalar_select %p26, %s27, %s28
      %p32 = pneg %p26
      %p33 = scmp.eq.s32.totalorder %s17, 1
      %p34 = por %p32, %p33
      %p35 = scmp.ne.s32.totalorder %s27, %s30
      %p36 = scmp.eq.s32.totalorder %s17, 0
      %p37 = por %p35, %p36
      %p38 = scmp.ne.s32.totalorder %s27, %s30
      %p39 = scmp.eq.s32.totalorder %s22, 1
      %p40 = por %p38, %p39
      %p41 = scmp.ne.s32.totalorder %s30, %s31
      %p42 = scmp.eq.s32.totalorder %s22, 0
      %p43 = por %p41, %p42
      %p44 = scmp.ne.s32.totalorder %s30, %s31
      %p45 = scmp.eq.s32.totalorder %s23, 1
      %p46 = por %p44, %p45
      %p48 = scmp.ne.s32.totalorder %s31, %s47
      %p49 = scmp.eq.s32.totalorder %s23, 0
      %p50 = por %p48, %p49
      %s52 = sadd.s32 %s51, 1
      %p55 = scmp.eq.s32.totalorder %s17, 1
      %p56 = scmp.ne.s32.totalorder %s51, %s53
      %p57 = scmp.eq.s32.totalorder %s17, 0
      %p58 = por %p56, %p57
      %p59 = scmp.ne.s32.totalorder %s51, %s53
      %p60 = scmp.eq.s32.totalorder %s22, 1
      %p61 = por %p59, %p60
      %p62 = scmp.ne.s32.totalorder %s53, %s54
      %p63 = scmp.eq.s32.totalorder %s22, 0
      %p64 = por %p62, %p63
      %p65 = scmp.ne.s32.totalorder %s53, %s54
      %p66 = scmp.eq.s32.totalorder %s23, 1
      %p67 = por %p65, %p66
      %p69 = scmp.ne.s32.totalorder %s54, %s68
      %p70 = scmp.eq.s32.totalorder %s23, 0
      %p71 = por %p69, %p70
      %s73 = sadd.s32 %s72, 1
      %p76 = scmp.eq.s32.totalorder %s17, 1
      %p77 = scmp.ne.s32.totalorder %s72, %s74
      %p78 = scmp.eq.s32.totalorder %s17, 0
      %p79 = por %p77, %p78
      %p80 = scmp.ne.s32.totalorder %s72, %s74
      %p81 = scmp.eq.s32.totalorder %s22, 1
      %p82 = por %p80, %p81
      %p83 = scmp.ne.s32.totalorder %s74, %s75
      %p84 = scmp.eq.s32.totalorder %s22, 0
      %p85 = por %p83, %p84
      %p86 = scmp.ne.s32.totalorder %s74, %s75
      %p87 = scmp.eq.s32.totalorder %s23, 1
      %p88 = por %p86, %p87
      %p90 = scmp.ne.s32.totalorder %s75, %s89
      %p91 = scmp.eq.s32.totalorder %s23, 0
      %p92 = por %p90, %p91
      %s94 = sadd.s32 %s93, 1
      %p97 = scmp.eq.s32.totalorder %s17, 1
      %p98 = scmp.ne.s32.totalorder %s93, %s95
      %p99 = scmp.eq.s32.totalorder %s17, 0
      %p100 = por %p98, %p99
      %p101 = scmp.ne.s32.totalorder %s93, %s95
      %p102 = scmp.eq.s32.totalorder %s22, 1
      %p103 = por %p101, %p102
      %p104 = scmp.ne.s32.totalorder %s95, %s96
      %p105 = scmp.eq.s32.totalorder %s22, 0
      %p106 = por %p104, %p105
      %p107 = scmp.ne.s32.totalorder %s95, %s96
      %p108 = scmp.eq.s32.totalorder %s23, 1
      %p109 = por %p107, %p108
      %p111 = scmp.ne.s32.totalorder %s96, %s110
      %p112 = scmp.eq.s32.totalorder %s23, 0
      %p113 = por %p111, %p112
      %s115 = sadd.s32 %s114, 1
      %p118 = scmp.eq.s32.totalorder %s17, 1
      %p119 = scmp.ne.s32.totalorder %s114, %s116
      %p120 = scmp.eq.s32.totalorder %s17, 0
      %p121 = por %p119, %p120
      %p122 = scmp.ne.s32.totalorder %s114, %s116
      %p123 = scmp.eq.s32.totalorder %s22, 1
      %p124 = por %p122, %p123
      %p125 = scmp.ne.s32.totalorder %s116, %s117
      %p126 = scmp.eq.s32.totalorder %s22, 0
      %p127 = por %p125, %p126
      %p128 = scmp.ne.s32.totalorder %s116, %s117
      %p129 = scmp.eq.s32.totalorder %s23, 1
      %p130 = por %p128, %p129
      %p132 = scmp.ne.s32.totalorder %s117, %s131
      %p133 = scmp.eq.s32.totalorder %s23, 0
      %p134 = por %p132, %p133
      %s136 = sadd.s32 %s135, 1
      %p139 = scmp.eq.s32.totalorder %s17, 1
      %p140 = scmp.ne.s32.totalorder %s135, %s137
      %p141 = scmp.eq.s32.totalorder %s17, 0
      %p142 = por %p140, %p141
      %p143 = scmp.ne.s32.totalorder %s135, %s137
      %p144 = scmp.eq.s32.totalorder %s22, 1
      %p145 = por %p143, %p144
      %p146 = scmp.ne.s32.totalorder %s137, %s138
      %p147 = scmp.eq.s32.totalorder %s22, 0
      %p148 = por %p146, %p147
      %p149 = scmp.ne.s32.totalorder %s137, %s138
      %p150 = scmp.eq.s32.totalorder %s23, 1
      %p151 = por %p149, %p150
      %p153 = scmp.ne.s32.totalorder %s138, %s152
      %p154 = scmp.eq.s32.totalorder %s23, 0
      %p155 = por %p153, %p154
      %s157 = sadd.s32 %s156, 1
      %p160 = scmp.eq.s32.totalorder %s17, 1
      %p161 = scmp.ne.s32.totalorder %s156, %s158
      %p162 = scmp.eq.s32.totalorder %s17, 0
      %p163 = por %p161, %p162
      %p164 = scmp.ne.s32.totalorder %s156, %s158
      %p165 = scmp.eq.s32.totalorder %s22, 1
      %p166 = por %p164, %p165
      %p167 = scmp.ne.s32.totalorder %s158, %s159
      %p168 = scmp.eq.s32.totalorder %s22, 0
      %p169 = por %p167, %p168
      %p170 = scmp.ne.s32.totalorder %s158, %s159
      %p171 = scmp.eq.s32.totalorder %s23, 1
      %p172 = por %p170, %p171
      %p174 = scmp.ne.s32.totalorder %s159, %s173
      %p175 = scmp.eq.s32.totalorder %s23, 0
      %p176 = por %p174, %p175
      %s178 = sadd.s32 %s177, 1
      %p181 = scmp.eq.s32.totalorder %s17, 1
      %p182 = scmp.ne.s32.totalorder %s177, %s179
      %p183 = scmp.eq.s32.totalorder %s17, 0
      %p184 = por %p182, %p183
      %p185 = scmp.ne.s32.totalorder %s177, %s179
      %p186 = scmp.eq.s32.totalorder %s22, 1
      %p187 = por %p185, %p186
      %p188 = scmp.ne.s32.totalorder %s179, %s180
      %p189 = scmp.eq.s32.totalorder %s22, 0
      %p190 = por %p188, %p189
      %p191 = scmp.ne.s32.totalorder %s179, %s180
      %p192 = scmp.eq.s32.totalorder %s23, 1
      %p193 = por %p191, %p192
      %p195 = scmp.ne.s32.totalorder %s180, %s194
      %p196 = scmp.eq.s32.totalorder %s23, 0
      %p197 = por %p195, %p196
      %s198 = ssub.s32 %s17, %s24
      %p199 = scmp.eq.s32.totalorder %s198, 0
      %s201 = sadd.s32 %s200, 1
      %s202 = scalar_select %p199, %s200, %s201
      %p205 = pneg %p199
      %p206 = scmp.eq.s32.totalorder %s17, 1
      %p207 = por %p205, %p206
      %p208 = scmp.ne.s32.totalorder %s200, %s203
      %p209 = scmp.eq.s32.totalorder %s17, 0
      %p210 = por %p208, %p209
      %p211 = scmp.ne.s32.totalorder %s200, %s203
      %p212 = scmp.eq.s32.totalorder %s22, 1
      %p213 = por %p211, %p212
      %p214 = scmp.ne.s32.totalorder %s203, %s204
      %p215 = scmp.eq.s32.totalorder %s22, 0
      %p216 = por %p214, %p215
      %p217 = scmp.ne.s32.totalorder %s203, %s204
      %p218 = scmp.eq.s32.totalorder %s23, 1
      %p219 = por %p217, %p218
      %p221 = scmp.ne.s32.totalorder %s204, %s220
      %p222 = scmp.eq.s32.totalorder %s23, 0
      %p223 = por %p221, %p222
      %p224 = scmp.le.s32.totalorder 1, %s17
      %p225 = scmp.lt.s32.totalorder %s17, 3
      %p226 = pnand %p224, %p225
      %p227 = pneg %p226
      // Predicated region
      $region9: #{tpu_custom_call.1} parent=5 // pred_check
        _
      $region10: #{tpu_custom_call.1} parent=5 // pred_check_branch
        %229 = sbr.rel (%p226) target = $region12
      $region11: #{tpu_custom_call.1} parent=5 // pred_region
        %s230 = ssub.s32 %s17, 1
        // Predicated region
        $region13: #{tpu_custom_call.1} parent=11 // pred_check
          %p231 = pneg %p64
        $region14: #{tpu_custom_call.1} parent=11 // pred_check_branch
          %233 = sbr.rel (%p231) target = $region16
        $region15: #{tpu_custom_call.1} parent=11 // pred_region
          _
        $region16: #{tpu_custom_call.1} parent=11 // pred_fallthru
          _
        // Predicated region
        $region17: #{tpu_custom_call.1} parent=11 // pred_check
          %p234 = pneg %p85
        $region18: #{tpu_custom_call.1} parent=11 // pred_check_branch
          %236 = sbr.rel (%p234) target = $region20
        $region19: #{tpu_custom_call.1} parent=11 // pred_region
          _
        $region20: #{tpu_custom_call.1} parent=11 // pred_fallthru
          _
        // Predicated region
        $region21: #{tpu_custom_call.1} parent=11 // pred_check
          %p237 = pneg %p106
        $region22: #{tpu_custom_call.1} parent=11 // pred_check_branch
          %239 = sbr.rel (%p237) target = $region24
        $region23: #{tpu_custom_call.1} parent=11 // pred_region
          _
        $region24: #{tpu_custom_call.1} parent=11 // pred_fallthru
          _
        // Predicated region
        $region25: #{tpu_custom_call.1} parent=11 // pred_check
          %p240 = pneg %p127
        $region26: #{tpu_custom_call.1} parent=11 // pred_check_branch
          %242 = sbr.rel (%p240) target = $region28
        $region27: #{tpu_custom_call.1} parent=11 // pred_region
          _
        $region28: #{tpu_custom_call.1} parent=11 // pred_fallthru
          _
        // Predicated region
        $region29: #{tpu_custom_call.1} parent=11 // pred_check
          %p243 = pneg %p148
        $region30: #{tpu_custom_call.1} parent=11 // pred_check_branch
          %245 = sbr.rel (%p243) target = $region32
        $region31: #{tpu_custom_call.1} parent=11 // pred_region
          _
        $region32: #{tpu_custom_call.1} parent=11 // pred_fallthru
          _
        // Predicated region
        $region33: #{tpu_custom_call.1} parent=11 // pred_check
          %p246 = pneg %p169
        $region34: #{tpu_custom_call.1} parent=11 // pred_check_branch
          %248 = sbr.rel (%p246) target = $region36
        $region35: #{tpu_custom_call.1} parent=11 // pred_region
          _
        $region36: #{tpu_custom_call.1} parent=11 // pred_fallthru
          _
        // Predicated region
        $region37: #{tpu_custom_call.1} parent=11 // pred_check
          %p249 = pneg %p190
        $region38: #{tpu_custom_call.1} parent=11 // pred_check_branch
          %251 = sbr.rel (%p249) target = $region40
        $region39: #{tpu_custom_call.1} parent=11 // pred_region
          _
        $region40: #{tpu_custom_call.1} parent=11 // pred_fallthru
          _
      $region12: #{tpu_custom_call.1} parent=5 // pred_fallthru
        _
      %p252 = scmp.lt.s32.totalorder %s17, 2
      // Predicated region
      $region41: #{tpu_custom_call.1} parent=5 // pred_check
        %p253 = pneg %p252
      $region42: #{tpu_custom_call.1} parent=5 // pred_check_branch
        %255 = sbr.rel (%p253) target = $region44
      $region43: #{tpu_custom_call.1} parent=5 // pred_region
        // Predicated region
        $region45: #{tpu_custom_call.1} parent=43 // pred_check
          %p256 = pneg %p37
        $region46: #{tpu_custom_call.1} parent=43 // pred_check_branch
          %258 = sbr.rel (%p256) target = $region48
        $region47: #{tpu_custom_call.1} parent=43 // pred_region
          %p259 = scmp.lt.s32.totalorder %s17, 1
          %s260 = scalar_select %p259, %s17, 1
          %s261 = smul.addr %s260, 2
          %s262 = smul.addr %s261, 4
          %s263 = scalar_lea.vmem %s0, %s262
        $region48: #{tpu_custom_call.1} parent=43 // pred_fallthru
          _
      $region44: #{tpu_custom_call.1} parent=5 // pred_fallthru
        _
      %p264 = scmp.le.s32.totalorder 1, %s17
      %p265 = scmp.lt.s32.totalorder %s17, 3
      %p266 = pnand %p264, %p265
      %p267 = pneg %p266
      // Predicated region
      $region49: #{tpu_custom_call.1} parent=5 // pred_check
        _
      $region50: #{tpu_custom_call.1} parent=5 // pred_check_branch
        %269 = sbr.rel (%p266) target = $region52
      $region51: #{tpu_custom_call.1} parent=5 // pred_region
        %s270 = ssub.s32 %s17, 1
        %p271 = scmp.lt.s32.totalorder %s22, 1
        %s272 = scalar_select %p271, %s22, 1
        %s273 = smul.addr %s272, 2
        %s274 = smul.addr %s273, 4
        %s275 = scalar_lea.vmem %s0, %s274
        %p276 = pneg %p43
        %p277 = pneg %p40
        %p278 = pneg %p64
        %p279 = pneg %p61
        %p280 = pneg %p85
        %p281 = pneg %p82
        %p282 = pneg %p106
        %p283 = pneg %p103
        %p284 = pneg %p127
        %p285 = pneg %p124
        %p286 = pneg %p148
        %p287 = pneg %p145
        %p288 = pneg %p169
        %p289 = pneg %p166
        %p290 = pneg %p190
        %p291 = pneg %p187
        %p292 = pneg %p216
        %p293 = pneg %p213
        %s294 = sand.u32 %s203, 1
        %s295 = scalar_lea.sflag [#allocation4], %s294
        %s296 = sand.u32 %s203, 1
        %s297 = smul.addr %s296, 16
        %s298 = scalar_lea.vmem [#allocation3], %s297
        %p299 = scmp.lt.s32.totalorder %s22, 1
        %s300 = scalar_select %p299, %s22, 1
        %s301 = smul.addr %s300, 2
        %s302 = smul.addr %s301, 4
        %s303 = scalar_lea.vmem %s0, %s302
        %v305 = vld [vmem:[%s303] sm:$0xff]
        %v306 = vld [vmem:[%s1] sm:$0xf]
        %v307 = vld [vmem:[%s1 + $0x4] sm:$0xf]
        %v308 = vld [vmem:[%s1 + $0x8] sm:$0xf]
        %v309 = vld [vmem:[%s1 + $0xc] sm:$0xf]
        %v310 = vld [vmem:[%s1 + $0x10] sm:$0xf]
        %v311 = vld [vmem:[%s1 + $0x14] sm:$0xf]
        %v312 = vld [vmem:[%s1 + $0x18] sm:$0xf]
        %v313 = vld [vmem:[%s1 + $0x1c] sm:$0xf]
        %v314 = vld [vmem:[%s1 + $0x20] sm:$0xf]
        %v315 = vld [vmem:[%s1 + $0x24] sm:$0xf]
        %v316 = vld [vmem:[%s1 + $0x28] sm:$0xf]
        %v317 = vld [vmem:[%s1 + $0x2c] sm:$0xf]
        %v318 = vld [vmem:[%s1 + $0x30] sm:$0xf]
        %v319 = vld [vmem:[%s1 + $0x34] sm:$0xf]
        %v320 = vld [vmem:[%s1 + $0x38] sm:$0xf]
        %v321 = vld [vmem:[%s1 + $0x3c] sm:$0xf]
        %v322 = vld [vmem:[%s1 + $0x40] sm:$0xf]
        %v323 = vld [vmem:[%s1 + $0x44] sm:$0xf]
        %v324 = vld [vmem:[%s1 + $0x48] sm:$0xf]
        %v325 = vld [vmem:[%s1 + $0x4c] sm:$0xf]
        %v326 = vld [vmem:[%s1 + $0x50] sm:$0xf]
        %v327 = vld [vmem:[%s1 + $0x54] sm:$0xf]
        %v328 = vld [vmem:[%s1 + $0x58] sm:$0xf]
        %v329 = vld [vmem:[%s1 + $0x5c] sm:$0xf]
        %v330 = vld [vmem:[%s1 + $0x60] sm:$0xf]
        %v331 = vld [vmem:[%s1 + $0x64] sm:$0xf]
        %v332 = vld [vmem:[%s1 + $0x68] sm:$0xf]
        %v333 = vld [vmem:[%s1 + $0x6c] sm:$0xf]
        %v334 = vld [vmem:[%s1 + $0x70] sm:$0xf]
        %v335 = vld [vmem:[%s1 + $0x74] sm:$0xf]
        %v336 = vld [vmem:[%s1 + $0x78] sm:$0xf]
        %v337 = vld [vmem:[%s1 + $0x7c] sm:$0xf]
        %v339 = vunpack.c.l.b16 %v305
        %v340 = vunpack.c.h.b16 %v305
        %v341 = vpack.c.b16 %v339, %v339
        %v342 = vpack.c.b16 %v340, %v340
        %v377 = vunpack.c.l.b16 %v306
        %v378 = vunpack.c.l.b16 %v307
        %v379 = vunpack.c.l.b16 %v308
        %v380 = vunpack.c.l.b16 %v309
        %v381 = vunpack.c.l.b16 %v310
        %v382 = vunpack.c.l.b16 %v311
        %v383 = vunpack.c.l.b16 %v312
        %v384 = vunpack.c.l.b16 %v313
        %v385 = vunpack.c.l.b16 %v314
        %v386 = vunpack.c.l.b16 %v315
        %v387 = vunpack.c.l.b16 %v316
        %v388 = vunpack.c.l.b16 %v317
        %v389 = vunpack.c.l.b16 %v318
        %v390 = vunpack.c.l.b16 %v319
        %v391 = vunpack.c.l.b16 %v320
        %v392 = vunpack.c.l.b16 %v321
        %v393 = vunpack.c.l.b16 %v322
        %v394 = vunpack.c.l.b16 %v323
        %v395 = vunpack.c.l.b16 %v324
        %v396 = vunpack.c.l.b16 %v325
        %v397 = vunpack.c.l.b16 %v326
        %v398 = vunpack.c.l.b16 %v327
        %v399 = vunpack.c.l.b16 %v328
        %v400 = vunpack.c.l.b16 %v329
        %v401 = vunpack.c.l.b16 %v330
        %v402 = vunpack.c.l.b16 %v331
        %v403 = vunpack.c.l.b16 %v332
        %v404 = vunpack.c.l.b16 %v333
        %v405 = vunpack.c.l.b16 %v334
        %v406 = vunpack.c.l.b16 %v335
        %v407 = vunpack.c.l.b16 %v336
        %v408 = vunpack.c.l.b16 %v337
        %v409 = vpack.c.b16 %v378, %v377
        %v410 = vpack.c.b16 %v380, %v379
        %v411 = vpack.c.b16 %v382, %v381
        %v412 = vpack.c.b16 %v384, %v383
        %v413 = vpack.c.b16 %v386, %v385
        %v414 = vpack.c.b16 %v388, %v387
        %v415 = vpack.c.b16 %v390, %v389
        %v416 = vpack.c.b16 %v392, %v391
        %v417 = vpack.c.b16 %v394, %v393
        %v418 = vpack.c.b16 %v396, %v395
        %v419 = vpack.c.b16 %v398, %v397
        %v420 = vpack.c.b16 %v400, %v399
        %v421 = vpack.c.b16 %v402, %v401
        %v422 = vpack.c.b16 %v404, %v403
        %v423 = vpack.c.b16 %v406, %v405
        %v424 = vpack.c.b16 %v408, %v407
        %441 = vmatprep.subr.bf16.mxu0 0
        %442 = vmatpush1.bf16.msra.mxu0 %v409
        %443 = vmatprep.subr.bf16.mxu0 0
        %444 = vmatpush1.bf16.msra.mxu0 %v410
        %445 = vmatprep.subr.bf16.mxu0 0
        %446 = vmatpush1.bf16.msra.mxu0 %v411
        %447 = vmatprep.subr.bf16.mxu0 0
        %448 = vmatpush1.bf16.msra.mxu0 %v412
        %449 = vmatprep.subr.bf16.mxu0 0
        %450 = vmatpush1.bf16.msra.mxu0 %v413
        %451 = vmatprep.subr.bf16.mxu0 0
        %452 = vmatpush1.bf16.msra.mxu0 %v414
        %453 = vmatprep.subr.bf16.mxu0 0
        %454 = vmatpush1.bf16.msra.mxu0 %v415
        %455 = vmatprep.subr.bf16.mxu0 0
        %456 = vmatpush1.bf16.msra.mxu0 %v416
        %457 = vmatprep.subr.bf16.mxu0 0
        %458 = vmatpush1.bf16.msra.mxu0 %v417
        %459 = vmatprep.subr.bf16.mxu0 0
        %460 = vmatpush1.bf16.msra.mxu0 %v418
        %461 = vmatprep.subr.bf16.mxu0 0
        %462 = vmatpush1.bf16.msra.mxu0 %v419
        %463 = vmatprep.subr.bf16.mxu0 0
        %464 = vmatpush1.bf16.msra.mxu0 %v420
        %465 = vmatprep.subr.bf16.mxu0 0
        %466 = vmatpush1.bf16.msra.mxu0 %v421
        %467 = vmatprep.subr.bf16.mxu0 0
        %468 = vmatpush1.bf16.msra.mxu0 %v422
        %469 = vmatprep.subr.bf16.mxu0 0
        %470 = vmatpush1.bf16.msra.mxu0 %v423
        %471 = vmatprep.subr.bf16.mxu0 0
        %472 = vmatpush1.bf16.msra.mxu0 %v424
        %473 = vmatprep.mubr.bf16.mxu0 %v342
        %474 = vmatmul.mubr.bf16.gmra.mrb[0].mxu0 %v341
        %v475 = vpop.f32.mrb[0].mxu0
        %v476 = vadd.f32 0.0, %v475
        %v477 = vpop.f32.mrb[0].mxu0
        %v478 = vpop.f32.mrb[0].mxu0
        %v479 = vpop.f32.mrb[0].mxu0
        %480 = vdwg.mxu0
        %v481 = vld [vmem:[%s2] sm:$0xf]
        %v482 = vpack.c.bf16 %v476, %v476
        %v483 = vld [vmem:[%s3] sm:$0xff]
        %485 = vset.pattern.permute.xlu0 0
        %486 = vperm.xlu0 %485, %v483
        %v487 = vpop.permute.xlu0 %486
        %vm489 = vcmask 64512
        %v491 = vsel %vm489, %v481, 0
        %vm493 = vcmask 1043456
        %v495 = vsel %vm493, %v482, 0
        %497 = vmatprep.subr.bf16.mxu0 0
        %498 = vmatpush1.bf16.msra.mxu0 %v495
        %499 = vmatprep.subr.bf16.mxu0 0
        %500 = vmatpush1.bf16.msra.mxu0 0
        %501 = vmatprep.subr.bf16.mxu0 0
        %502 = vmatpush1.bf16.msra.mxu0 0
        %503 = vmatprep.subr.bf16.mxu0 0
        %504 = vmatpush1.bf16.msra.mxu0 0
        %505 = vmatprep.subr.bf16.mxu0 0
        %506 = vmatpush1.bf16.msra.mxu0 0
        %507 = vmatprep.subr.bf16.mxu0 0
        %508 = vmatpush1.bf16.msra.mxu0 0
        %509 = vmatprep.subr.bf16.mxu0 0
        %510 = vmatpush1.bf16.msra.mxu0 0
        %511 = vmatprep.subr.bf16.mxu0 0
        %512 = vmatpush1.bf16.msra.mxu0 0
        %513 = vmatprep.subr.bf16.mxu0 0
        %514 = vmatpush1.bf16.msra.mxu0 0
        %515 = vmatprep.subr.bf16.mxu0 0
        %516 = vmatpush1.bf16.msra.mxu0 0
        %517 = vmatprep.subr.bf16.mxu0 0
        %518 = vmatpush1.bf16.msra.mxu0 0
        %519 = vmatprep.subr.bf16.mxu0 0
        %520 = vmatpush1.bf16.msra.mxu0 0
        %521 = vmatprep.subr.bf16.mxu0 0
        %522 = vmatpush1.bf16.msra.mxu0 0
        %523 = vmatprep.subr.bf16.mxu0 0
        %524 = vmatpush1.bf16.msra.mxu0 0
        %525 = vmatprep.subr.bf16.mxu0 0
        %526 = vmatpush1.bf16.msra.mxu0 0
        %527 = vmatprep.subr.bf16.mxu0 0
        %528 = vmatpush1.bf16.msra.mxu0 0
        %529 = vmatprep.mubr.bf16.mxu0 0
        %530 = vmatmul.mubr.bf16.gmra.mrb[0].mxu0 %v491
        %v531 = vpop.f32.mrb[0].mxu0
        %v532 = vadd.f32 %v487, %v531
        %v533 = vpop.f32.mrb[0].mxu0
        %v534 = vpop.f32.mrb[0].mxu0
        %v535 = vpop.f32.mrb[0].mxu0
        %536 = vdwg.mxu0
        %v537 = vmax.f32 %v532, 0.0
        %v538 = vld [vmem:[%s4] sm:$0xff]
        %v539 = vmul.f32 %v537, %v538
        %v540 = vpack.c.bf16 %v539, %v539
        %v541 = vld [vmem:[%s5] sm:$0xff]
        %v542 = vld [vmem:[%s5 + $0x8] sm:$0xff]
        %v543 = vld [vmem:[%s5 + $0x10] sm:$0xff]
        %v544 = vld [vmem:[%s5 + $0x18] sm:$0xff]
        %v545 = vld [vmem:[%s5 + $0x20] sm:$0xff]
        %v546 = vld [vmem:[%s5 + $0x28] sm:$0xff]
        %v547 = vld [vmem:[%s5 + $0x30] sm:$0xff]
        %v555 = vunpack.c.l.b16 %v541
        %v556 = vunpack.c.h.b16 %v541
        %v557 = vunpack.c.l.b16 %v542
        %v558 = vunpack.c.h.b16 %v542
        %v559 = vunpack.c.l.b16 %v543
        %v560 = vunpack.c.h.b16 %v543
        %v561 = vunpack.c.l.b16 %v544
        %v562 = vunpack.c.h.b16 %v544
        %v563 = vunpack.c.l.b16 %v545
        %v564 = vunpack.c.h.b16 %v545
        %v565 = vunpack.c.l.b16 %v546
        %v566 = vunpack.c.h.b16 %v546
        %v567 = vunpack.c.l.b16 %v547
        %v568 = vunpack.c.h.b16 %v547
        %v569 = vpack.c.b16 %v557, %v555
        %v570 = vpack.c.b16 %v558, %v556
        %v571 = vpack.c.b16 %v561, %v559
        %v572 = vpack.c.b16 %v562, %v560
        %v573 = vpack.c.b16 %v565, %v563
        %v574 = vpack.c.b16 %v566, %v564
        %v575 = vpack.c.b16 %v567, %v567
        %v576 = vpack.c.b16 %v568, %v568
        %vm583 = vcmask 457728
        %v585 = vsel %vm583, %v540, 0
        %v588 = vsel %vm493, %v575, 0
        %v591 = vsel %vm493, %v576, 0
        %593 = vmatprep.subr.bf16.mxu0 %v570
        %594 = vmatpush1.bf16.msra.mxu0 %v569
        %595 = vmatprep.subr.bf16.mxu0 %v572
        %596 = vmatpush1.bf16.msra.mxu0 %v571
        %597 = vmatprep.subr.bf16.mxu0 %v574
        %598 = vmatpush1.bf16.msra.mxu0 %v573
        %599 = vmatprep.subr.bf16.mxu0 %v591
        %600 = vmatpush1.bf16.msra.mxu0 %v588
        %601 = vmatprep.subr.bf16.mxu0 0
        %602 = vmatpush1.bf16.msra.mxu0 0
        %603 = vmatprep.subr.bf16.mxu0 0
        %604 = vmatpush1.bf16.msra.mxu0 0
        %605 = vmatprep.subr.bf16.mxu0 0
        %606 = vmatpush1.bf16.msra.mxu0 0
        %607 = vmatprep.subr.bf16.mxu0 0
        %608 = vmatpush1.bf16.msra.mxu0 0
        %609 = vmatprep.subr.bf16.mxu0 0
        %610 = vmatpush1.bf16.msra.mxu0 0
        %611 = vmatprep.subr.bf16.mxu0 0
        %612 = vmatpush1.bf16.msra.mxu0 0
        %613 = vmatprep.subr.bf16.mxu0 0
        %614 = vmatpush1.bf16.msra.mxu0 0
        %615 = vmatprep.subr.bf16.mxu0 0
        %616 = vmatpush1.bf16.msra.mxu0 0
        %617 = vmatprep.subr.bf16.mxu0 0
        %618 = vmatpush1.bf16.msra.mxu0 0
        %619 = vmatprep.subr.bf16.mxu0 0
        %620 = vmatpush1.bf16.msra.mxu0 0
        %621 = vmatprep.subr.bf16.mxu0 0
        %622 = vmatpush1.bf16.msra.mxu0 0
        %623 = vmatprep.subr.bf16.mxu0 0
        %624 = vmatpush1.bf16.msra.mxu0 0
        %625 = vmatprep.mubr.bf16.mxu0 0
        %626 = vmatmul.mubr.bf16.gmra.mrb[0].mxu0 %v585
        %v627 = vpop.f32.mrb[0].mxu0
        %v628 = vadd.f32 0.0, %v627
        %v629 = vpop.f32.mrb[0].mxu0
        %v630 = vadd.f32 0.0, %v629
        %v631 = vpop.f32.mrb[0].mxu0
        %v632 = vpop.f32.mrb[0].mxu0
        %633 = vdwg.mxu0
        %634 = vst [vmem:[#allocation2] sm:$0xf] %v341
        %635 = vst [vmem:[#allocation2 + $0x8] sm:$0xf] %v342
        %v636 = vpack.c.bf16 %v628, %v628
        %v637 = vpack.c.bf16 %v630, %v630
        %v640 = vrot.slane %v636, 4
        %v641 = vrot.slane %v637, 4
        %644 = vst [vmem:[#allocation2] sm:$0xf0] %v640
        %645 = vst [vmem:[#allocation2 + $0x8] sm:$0xf0] %v641
        %v646 = vld [vmem:[%s6] sm:$0xf]
        %v647 = vld [vmem:[#allocation2] sm:$0xff]
        %v648 = vld [vmem:[#allocation2 + $0x8] sm:$0xff]
        %v649 = vld [vmem:[%s7] sm:$0xff]
        %651 = vset.pattern.permute.xlu0 0
        %652 = vperm.xlu0 %651, %v649
        %v653 = vpop.permute.xlu0 %652
        %vm655 = vcmask 130048
        %v657 = vsel %vm655, %v646, 0
        %659 = vmatprep.subr.bf16.mxu0 %v648
        %660 = vmatpush1.bf16.msra.mxu0 %v647
        %661 = vmatprep.subr.bf16.mxu0 0
        %662 = vmatpush1.bf16.msra.mxu0 0
        %663 = vmatprep.subr.bf16.mxu0 0
        %664 = vmatpush1.bf16.msra.mxu0 0
        %665 = vmatprep.subr.bf16.mxu0 0
        %666 = vmatpush1.bf16.msra.mxu0 0
        %667 = vmatprep.subr.bf16.mxu0 0
        %668 = vmatpush1.bf16.msra.mxu0 0
        %669 = vmatprep.subr.bf16.mxu0 0
        %670 = vmatpush1.bf16.msra.mxu0 0
        %671 = vmatprep.subr.bf16.mxu0 0
        %672 = vmatpush1.bf16.msra.mxu0 0
        %673 = vmatprep.subr.bf16.mxu0 0
        %674 = vmatpush1.bf16.msra.mxu0 0
        %675 = vmatprep.subr.bf16.mxu0 0
        %676 = vmatpush1.bf16.msra.mxu0 0
        %677 = vmatprep.subr.bf16.mxu0 0
        %678 = vmatpush1.bf16.msra.mxu0 0
        %679 = vmatprep.subr.bf16.mxu0 0
        %680 = vmatpush1.bf16.msra.mxu0 0
        %681 = vmatprep.subr.bf16.mxu0 0
        %682 = vmatpush1.bf16.msra.mxu0 0
        %683 = vmatprep.subr.bf16.mxu0 0
        %684 = vmatpush1.bf16.msra.mxu0 0
        %685 = vmatprep.subr.bf16.mxu0 0
        %686 = vmatpush1.bf16.msra.mxu0 0
        %687 = vmatprep.subr.bf16.mxu0 0
        %688 = vmatpush1.bf16.msra.mxu0 0
        %689 = vmatprep.subr.bf16.mxu0 0
        %690 = vmatpush1.bf16.msra.mxu0 0
        %691 = vmatprep.mubr.bf16.mxu0 0
        %692 = vmatmul.mubr.bf16.gmra.mrb[0].mxu0 %v657
        %v693 = vpop.f32.mrb[0].mxu0
        %v694 = vadd.f32 %v653, %v693
        %v695 = vpop.f32.mrb[0].mxu0
        %v696 = vadd.f32 %v653, %v695
        %v697 = vpop.f32.mrb[0].mxu0
        %v698 = vpop.f32.mrb[0].mxu0
        %699 = vdwg.mxu0
        %v700 = vmax.f32 %v694, 0.0
        %v701 = vmax.f32 %v696, 0.0
        %702 = vst [vmem:[%s298] sm:$0xff] %v700
        %703 = vst [vmem:[%s298 + $0x8] sm:$0xff] %v701
        %s704 = sand.u32 %s203, 1
        %s705 = scalar_lea.sflag [#allocation4], %s704
        %s706 = sand.u32 %s203, 1
        %s707 = smul.addr %s706, 16
        %s708 = scalar_lea.vmem [#allocation3], %s707
        // Predicated region
        $region53: #{tpu_custom_call.1} parent=51 // pred_check
          %p709 = pneg %p213
        $region54: #{tpu_custom_call.1} parent=51 // pred_check_branch
          %711 = sbr.rel (%p709) target = $region56
        $region55: #{tpu_custom_call.1} parent=51 // pred_region
          %s713 = ssub.s32 256, 256
          %714 = vsyncadd %s705, %s713
          %s715 = smul.addr %s22, 2
          %s716 = smul.addr %s715, 128
          %s717 = scalar_lea.hbm %s8, %s716
          %s719 = sshll.u32 %s708, 4
          %s720 = int_to_ptr.vmem [resolvable:$true] %s719
          %722 = dma.vmem_to_hbm [thread:$0]  %s720, 256, %s717, %s705
        $region56: #{tpu_custom_call.1} parent=51 // pred_fallthru
          _
      $region52: #{tpu_custom_call.1} parent=5 // pred_fallthru
        _
      %p723 = scmp.le.s32.totalorder 2, %s17
      // Predicated region
      $region57: #{tpu_custom_call.1} parent=5 // pred_check
        %p724 = pneg %p723
      $region58: #{tpu_custom_call.1} parent=5 // pred_check_branch
        %726 = sbr.rel (%p724) target = $region60
      $region59: #{tpu_custom_call.1} parent=5 // pred_region
        %s727 = ssub.s32 %s17, 2
        // Predicated region
        $region61: #{tpu_custom_call.1} parent=59 // pred_check
          %p728 = pneg %p219
        $region62: #{tpu_custom_call.1} parent=59 // pred_check_branch
          %730 = sbr.rel (%p728) target = $region64
        $region63: #{tpu_custom_call.1} parent=59 // pred_region
          %s731 = sand.u32 %s204, 1
          %s732 = scalar_lea.sflag [#allocation4], %s731
          %s733 = sand.u32 %s204, 1
          %s734 = smul.addr %s733, 16
          %s735 = scalar_lea.vmem [#allocation3], %s734
          %736 = dma.done %s732, 256
        $region64: #{tpu_custom_call.1} parent=59 // pred_fallthru
          _
      $region60: #{tpu_custom_call.1} parent=5 // pred_fallthru
        _
    $region6: #{tpu_custom_call.1} parent=1 // loop_footer
      %s21 = sadd.s32 1, %s17
    $region7: #{tpu_custom_call.1} parent=1 // loop_footer_branch
      %16 = sbr.rel target = $region3
    $region8: #{tpu_custom_call.1} parent=1 // loop_exit
      _
    %737 = vsyncpa [#allocation4], 1
    %s738 = scalar_lea.sflag [#allocation4], 1
    %739 = vsyncpa %s738, 1

</llo_original>
